<compile_context>
chip_gen: v5e
topology: v5e:2x2
jax: 0.10.0
libtpu: 0.0.40
codegen_flags: <defaults>
</compile_context>

<pallas_src>
import functools
import itertools

import numpy as np
import jax
import jax.numpy as jnp
from jax import lax
from jax.experimental import pallas as pl
from jax.experimental.pallas import tpu as pltpu


# ----------------------------------------------------------------------------
# deterministic parameter init
# ----------------------------------------------------------------------------
_PARAM_KEY = jax.random.PRNGKey(42)
_counter = itertools.count()


def _next_key():
    return jax.random.fold_in(_PARAM_KEY, next(_counter))


def init_w(shape, fan_in):
    w = jax.random.normal(_next_key(), shape, jnp.float32)
    return (w / np.sqrt(float(fan_in))).astype(jnp.float32)


def _round_up(x, m):
    return ((x + m - 1) // m) * m


# ----------------------------------------------------------------------------
# Pallas kernel 1: K-tiled matmul (+ bias), bf16 inputs, f32 accumulation.
# Used for every conv / transposed conv / 1x1 projection / trilinear upsample.
# ----------------------------------------------------------------------------
def _matmul_kernel(a_ref, w_ref, b_ref, o_ref, acc_ref):
    k = pl.program_id(1)

    @pl.when(k == 0)
    def _():
        acc_ref[...] = jnp.zeros_like(acc_ref)

    acc_ref[...] += jnp.dot(a_ref[...], w_ref[...],
                            preferred_element_type=jnp.float32)

    @pl.when(k == pl.num_programs(1) - 1)
    def _():
        o_ref[...] = acc_ref[...] + b_ref[...]


@functools.lru_cache(maxsize=None)
def _matmul_call(Mp, TM, Kp, TK, Np):
    f = pl.pallas_call(
        _matmul_kernel,
        out_shape=jax.ShapeDtypeStruct((Mp, Np), jnp.float32),
        grid=(Mp // TM, Kp // TK),
        in_specs=[
            pl.BlockSpec((TM, TK), lambda i, k: (i, k)),
            pl.BlockSpec((TK, Np), lambda i, k: (k, 0)),   # weights resident in N
            pl.BlockSpec((1, Np), lambda i, k: (0, 0)),
        ],
        out_specs=pl.BlockSpec((TM, Np), lambda i, k: (i, 0)),
        scratch_shapes=[pltpu.VMEM((TM, Np), jnp.float32)],
        compiler_params=pltpu.CompilerParams(
            dimension_semantics=("parallel", "arbitrary")),
    )
    return jax.jit(f)


@functools.lru_cache(maxsize=None)
def _choose_k(K):
    """Pad K to a multiple of 128 and pick a K tile close to 512 that divides it."""
    Kp = _round_up(max(K, 128), 128)
    if Kp <= 1024:
        return Kp, Kp
    q = Kp // 128
    best_t, best_score = q, None
    for t in range(1, q + 1):
        if q % t == 0:
            score = abs(128 * t - 512)
            if best_score is None or score < best_score:
                best_score, best_t = score, t
    return Kp, 128 * best_t


def _choose_m(M):
    if M >= 128:
        return _round_up(M, 128), 128
    Mp = _round_up(max(M, 8), 8)
    return Mp, Mp


def prep_matmul_weight(w_mat, bias=None):
    """Pre-pad + pre-cast a (K, N) weight matrix (and bias) once at build time."""
    K, N = w_mat.shape
    Kp, TK = _choose_k(K)
    Np = _round_up(N, 128)
    wp = jnp.pad(jnp.asarray(w_mat, jnp.float32),
                 ((0, Kp - K), (0, Np - N))).astype(jnp.bfloat16)
    if bias is None:
        bp = jnp.zeros((1, Np), jnp.float32)
    else:
        bp = jnp.pad(jnp.asarray(bias, jnp.float32).reshape(1, N),
                     ((0, 0), (0, Np - N)))
    return {'w': wp, 'b': bp, 'K': K, 'N': N, 'Kp': Kp, 'Np': Np, 'TK': TK}


def matmul_prepared(a, rec):
    """a: (M, K) activation (any float dtype); weights pre-padded bf16."""
    M, K = a.shape
    assert K == rec['K']
    Mp, TM = _choose_m(M)
    a_p = a.astype(jnp.bfloat16)
    if Mp != M or rec['Kp'] != K:
        a_p = jnp.pad(a_p, ((0, Mp - M), (0, rec['Kp'] - K)))
    out = _matmul_call(Mp, TM, rec['Kp'], rec['TK'], rec['Np'])(a_p, rec['w'], rec['b'])
    return out[:M, :rec['N']]


def matmul_bias(a, w, bias=None):
    """Generic path (both operands dynamic) -- used only for the tiny upsample matmuls."""
    M, K = a.shape
    N = w.shape[1]
    Kp, TK = _choose_k(K)
    Np = _round_up(N, 128)
    Mp, TM = _choose_m(M)
    a_p = a.astype(jnp.bfloat16)
    if Mp != M or Kp != K:
        a_p = jnp.pad(a_p, ((0, Mp - M), (0, Kp - K)))
    w_p = w.astype(jnp.bfloat16)
    if Kp != K or Np != N:
        w_p = jnp.pad(w_p, ((0, Kp - K), (0, Np - N)))
    if bias is None:
        b_p = jnp.zeros((1, Np), jnp.float32)
    else:
        b_p = jnp.pad(jnp.asarray(bias, jnp.float32).reshape(1, N), ((0, 0), (0, Np - N)))
    out = _matmul_call(Mp, TM, Kp, TK, Np)(a_p, w_p, b_p)
    return out[:M, :N]


# ----------------------------------------------------------------------------
# Pallas kernel 2: InstanceNorm (affine=False, eps=1e-5) [+ LeakyReLU(0.01)]
#                  and fused InstanceNorm + residual add + LeakyReLU.
# Channel-last layout: x is (B, S, C), stats per (b, c) over S. Grid over B, "parallel".
# ----------------------------------------------------------------------------
def _inorm_kernel(x_ref, o_ref, *, eps, slope, act):
    x = x_ref[...]                                   # (1, S, C)
    mean = jnp.mean(x, axis=1, keepdims=True)
    c = x - mean
    var = jnp.mean(c * c, axis=1, keepdims=True)
    y = c * lax.rsqrt(var + eps)
    if act:
        y = jnp.where(y >= 0, y, y * slope)
    o_ref[...] = y


def _inorm_add_kernel(x_ref, r_ref, o_ref, *, eps, slope):
    x = x_ref[...]
    mean = jnp.mean(x, axis=1, keepdims=True)
    c = x - mean
    var = jnp.mean(c * c, axis=1, keepdims=True)
    y = c * lax.rsqrt(var + eps) + r_ref[...]
    o_ref[...] = jnp.where(y >= 0, y, y * slope)


@functools.lru_cache(maxsize=None)
def _inorm_call(B, S, C, act):
    f = pl.pallas_call(
        functools.partial(_inorm_kernel, eps=1e-5, slope=0.01, act=act),
        out_shape=jax.ShapeDtypeStruct((B, S, C), jnp.float32),
        grid=(B,),
        in_specs=[pl.BlockSpec((1, S, C), lambda b: (b, 0, 0))],
        out_specs=pl.BlockSpec((1, S, C), lambda b: (b, 0, 0)),
        compiler_params=pltpu.CompilerParams(dimension_semantics=("parallel",)),
    )
    return jax.jit(f)


@functools.lru_cache(maxsize=None)
def _inorm_add_call(B, S, C):
    f = pl.pallas_call(
        functools.partial(_inorm_add_kernel, eps=1e-5, slope=0.01),
        out_shape=jax.ShapeDtypeStruct((B, S, C), jnp.float32),
        grid=(B,),
        in_specs=[pl.BlockSpec((1, S, C), lambda b: (b, 0, 0)),
                  pl.BlockSpec((1, S, C), lambda b: (b, 0, 0))],
        out_specs=pl.BlockSpec((1, S, C), lambda b: (b, 0, 0)),
        compiler_params=pltpu.CompilerParams(dimension_semantics=("parallel",)),
    )
    return jax.jit(f)


def instance_norm_cl(x, act):
    B, H, W, D, C = x.shape
    S = H * W * D
    y = _inorm_call(B, S, C, bool(act))(x.reshape(B, S, C).astype(jnp.float32))
    return y.reshape(B, H, W, D, C)


def instance_norm_add_lrelu(x, res):
    B, H, W, D, C = x.shape
    S = H * W * D
    y = _inorm_add_call(B, S, C)(
        x.reshape(B, S, C).astype(jnp.float32),
        res.reshape(B, S, C).astype(jnp.float32))
    return y.reshape(B, H, W, D, C)


# ----------------------------------------------------------------------------
# Pallas kernel 3: fully fused scSE gating.
#   cSE: sigmoid(excite(squeeze(avgpool(U))))   (no biases, no intermediate act)
#   sSE: sigmoid(1x1 conv C->1), done as a per-voxel channel dot on the VPU/XLU.
#   out = U*cSE + U*sSE
# ----------------------------------------------------------------------------
def _scse_kernel(u_ref, wsq_ref, wex_ref, wsse_ref, o_ref):
    u = u_ref[...]                                        # (B, S, C)
    pooled = jnp.mean(u, axis=1)                          # (B, C)
    z1 = jnp.sum(pooled[:, :, None] * wsq_ref[...][None, :, :], axis=1)   # (B, C//2)
    z2 = jnp.sum(z1[:, :, None] * wex_ref[...][None, :, :], axis=1)       # (B, C)
    z = jax.nn.sigmoid(z2)                                # channel gate
    q = jax.nn.sigmoid(jnp.sum(u * wsse_ref[...][0][None, None, :],
                               axis=2, keepdims=True))    # (B, S, 1) spatial gate
    o_ref[...] = u * z[:, None, :] + u * q


@functools.lru_cache(maxsize=None)
def _scse_call(B, S, C):
    f = pl.pallas_call(
        _scse_kernel,
        out_shape=jax.ShapeDtypeStruct((B, S, C), jnp.float32),
        grid=(1,),
        in_specs=[pl.BlockSpec((B, S, C), lambda i: (0, 0, 0)),
                  pl.BlockSpec((C, C // 2), lambda i: (0, 0)),
                  pl.BlockSpec((C // 2, C), lambda i: (0, 0)),
                  pl.BlockSpec((1, C), lambda i: (0, 0))],
        out_specs=pl.BlockSpec((B, S, C), lambda i: (0, 0, 0)),
    )
    return jax.jit(f)


def scse_apply(U, p):
    B, H, W, D, C = U.shape
    S = H * W * D
    out = _scse_call(B, S, C)(U.reshape(B, S, C).astype(jnp.float32),
                              p['wsq'], p['wex'], p['wsse'])
    return out.reshape(B, H, W, D, C)


# ----------------------------------------------------------------------------
# Pallas kernel 4: MSFF fusion, batched over all (batch, class) pairs.
#   feats (G, 6, S) -> avgpool -> conv1d(k=3, pad=1, no bias) -> softmax(6) -> weighted sum
# ----------------------------------------------------------------------------
def _msff_kernel(f_ref, w_ref, o_ref):
    f = f_ref[...]                                   # (G, 6, S)
    m = jnp.mean(f, axis=2)                          # (G, 6) global avg pool per scale
    G = m.shape[0]
    zero = jnp.zeros((G, 1), jnp.float32)
    mp = jnp.concatenate([zero, m, zero], axis=1)    # (G, 8)  conv1d pad=1
    w0 = w_ref[0]
    w1 = w_ref[1]
    w2 = w_ref[2]
    y = w0 * mp[:, 0:6] + w1 * mp[:, 1:7] + w2 * mp[:, 2:8]
    y = y - jnp.max(y, axis=1, keepdims=True)
    e = jnp.exp(y)
    sm = e * pl.reciprocal(jnp.sum(e, axis=1, keepdims=True), approx=True)
    o_ref[...] = jnp.sum(sm[:, :, None] * f, axis=1)


@functools.lru_cache(maxsize=None)
def _msff_call(G, S):
    f = pl.pallas_call(
        _msff_kernel,
        out_shape=jax.ShapeDtypeStruct((G, S), jnp.float32),
        grid=(1,),
        in_specs=[pl.BlockSpec((G, 6, S), lambda i: (0, 0, 0)),
                  pl.BlockSpec(memory_space=pltpu.MemorySpace.SMEM)],
        out_specs=pl.BlockSpec((G, S), lambda i: (0, 0)),
    )
    return jax.jit(f)


# ----------------------------------------------------------------------------
# conv / transposed-conv / upsample wrappers (channel-last glue + Pallas matmul)
# ----------------------------------------------------------------------------
def prep_conv_weight(w, bias=None):
    """w: (Cout, Cin, kh, kw, kd) -> (taps*Cin, Cout) matrix, tap-major then Cin."""
    Cout, Cin, kh, kw, kd = w.shape
    wm = jnp.transpose(w, (2, 3, 4, 1, 0)).reshape(kh * kw * kd * Cin, Cout)
    rec = prep_matmul_weight(wm, bias)
    rec['ksize'] = (kh, kw, kd)
    rec['Cin'] = Cin
    return rec


def prep_convtrans_weight(w):
    """w: (Cin, Cout, 2, 2, 1) -> (Cin, Cout*4) matrix, columns ordered (cout, a, c)."""
    Cin, Cout = int(w.shape[0]), int(w.shape[1])
    rec = prep_matmul_weight(w.reshape(Cin, Cout * 4))
    rec['Cout'] = Cout
    return rec


def conv3d_cl(x, rec):
    """x: (B, H, W, D, Cin) channel-last, 'same' padding for odd kernels."""
    B, H, W, D, Cin = x.shape
    kh, kw, kd = rec['ksize']
    if (kh, kw, kd) == (1, 1, 1):
        A = x.reshape(B * H * W * D, Cin).astype(jnp.bfloat16)
    else:
        ph, pw, pd = kh // 2, kw // 2, kd // 2
        xp = jnp.pad(x, ((0, 0), (ph, ph), (pw, pw), (pd, pd), (0, 0)))
        xb = xp.astype(jnp.bfloat16)
        cols = [xb[:, i:i + H, j:j + W, k:k + D, :]
                for i in range(kh) for j in range(kw) for k in range(kd)]
        A = jnp.concatenate(cols, axis=-1).reshape(B * H * W * D, kh * kw * kd * Cin)
    out = matmul_prepared(A, rec)
    return out.reshape(B, H, W, D, rec['N'])


def conv_transpose_221_cl(x, rec):
    """ConvTranspose3d, kernel=stride=(2,2,1). x: (B,H,W,D,Cin) -> (B,2H,2W,D,Cout)."""
    B, H, W, D, Cin = x.shape
    Cout = rec['Cout']
    A = x.reshape(B * H * W * D, Cin).astype(jnp.bfloat16)
    y = matmul_prepared(A, rec)
    y = y.reshape(B, H, W, D, Cout, 2, 2)
    y = jnp.transpose(y, (0, 1, 5, 2, 6, 3, 4))               # (B, H, 2, W, 2, D, Cout)
    return y.reshape(B, 2 * H, 2 * W, D, Cout)


@functools.lru_cache(maxsize=None)
def _interp_matrix(n):
    """1D linear interpolation matrix (2n, n), align_corners=True."""
    m = 2 * n
    M = np.zeros((m, n), np.float32)
    if n == 1:
        M[:, 0] = 1.0
        return jnp.asarray(M)
    scale = (n - 1) / (m - 1)
    for i in range(m):
        src = i * scale
        lo = int(np.floor(src))
        hi = min(lo + 1, n - 1)
        frac = src - lo
        M[i, lo] += 1.0 - frac
        M[i, hi] += frac
    return jnp.asarray(M)


def unpool_221_cl(x):
    """Trilinear upsample, scale (2,2,1), align_corners=True, channel-last."""
    B, H, W, D, C = x.shape
    Mh = _interp_matrix(H)
    Mw = _interp_matrix(W)
    xh = jnp.transpose(x, (1, 0, 2, 3, 4)).reshape(H, B * W * D * C)
    y = matmul_bias(Mh, xh).reshape(2 * H, B, W, D, C)
    yw = jnp.transpose(y, (2, 1, 0, 3, 4)).reshape(W, B * 2 * H * D * C)
    z = matmul_bias(Mw, yw).reshape(2 * W, B, 2 * H, D, C)
    return jnp.transpose(z, (1, 2, 0, 3, 4))


# ----------------------------------------------------------------------------
# network building blocks (channel-last)
# ----------------------------------------------------------------------------
def unet_res_block(x, p):
    out = conv3d_cl(x, p['conv1'])
    out = instance_norm_cl(out, act=True)
    out = conv3d_cl(out, p['conv2'])
    if 'conv3' in p:
        res = instance_norm_cl(conv3d_cl(x, p['conv3']), act=False)
    else:
        res = x
    # fused: InstanceNorm(out) + res -> LeakyReLU
    return instance_norm_add_lrelu(out, res)


def unetr_up_block(x, skip, p):
    up = conv_transpose_221_cl(x, p['transp'])
    cat = jnp.concatenate([up, skip], axis=-1)
    return unet_res_block(cat, p['res'])


def feature_extraction_block(x, p):
    for blk in p['blocks']:
        x = unet_res_block(x, blk['res'])
        x = scse_apply(x, blk['scse'])
    return conv3d_cl(x, p['out'])


def encoder_stub(x_cl, enc_recs):
    # TODO(synk): deterministic stand-in for ShuntedTransformer3D hidden_states_out.
    feats = []
    cur = x_cl
    for rec in enc_recs:
        B, H, W, D, C = cur.shape
        cur = cur.reshape(B, H // 2, 2, W // 2, 2, D, C).mean(axis=(2, 4))
        cur = conv3d_cl(cur, rec)
        cur = instance_norm_cl(cur, act=True)
        feats.append(cur)
    return feats


# ----------------------------------------------------------------------------
# parameter construction (weights prepared / padded / bf16-cast once)
# ----------------------------------------------------------------------------
def init_res(cin, cout):
    p = {'conv1': prep_conv_weight(init_w((cout, cin, 3, 3, 3), cin * 27)),
         'conv2': prep_conv_weight(init_w((cout, cout, 3, 3, 3), cout * 27))}
    if cin != cout:
        p['conv3'] = prep_conv_weight(init_w((cout, cin, 1, 1, 1), cin))
    return p


def init_up(cin, cout):
    return {'transp': prep_convtrans_weight(init_w((cin, cout, 2, 2, 1), cin * 4)),
            'res': init_res(2 * cout, cout)}


def init_scse(c):
    return {'wsq': init_w((c, c // 2), c),
            'wex': init_w((c // 2, c), c // 2),
            'wsse': init_w((1, c), c)}


def init_feb(chlist, out_ch):
    return {'blocks': [{'res': init_res(chlist[i], chlist[i + 1]),
                        'scse': init_scse(chlist[i + 1])}
                       for i in range(len(chlist) - 1)],
            'out': prep_conv_weight(init_w((out_ch, 32, 1, 1, 1), 32),
                                    jnp.zeros((out_ch,), jnp.float32))}


def build_params(in_ch, out_ch, fs=32):
    P = {}
    enc_ch = [fs, fs * 2, fs * 4, fs * 8, fs * 16]
    enc, prev = [], in_ch
    for c in enc_ch:
        enc.append(prep_conv_weight(init_w((c, prev, 1, 1, 1), prev)))
        prev = c
    P['enc'] = enc
    P['rb0'] = init_res(in_ch, fs)
    P['rb1'] = init_res(32, fs)
    P['rb2'] = init_res(fs * 2, fs * 2)
    P['rb3'] = init_res(fs * 4, fs * 4)
    P['rb4'] = init_res(fs * 8, fs * 8)
    P['rb5'] = init_res(fs * 16, fs * 16)
    P['up5'] = init_up(fs * 16, fs * 8)
    P['up4'] = init_up(fs * 8, fs * 4)
    P['up3'] = init_up(fs * 4, fs * 2)
    P['up2'] = init_up(fs * 2, fs)
    P['up1'] = init_up(fs, fs)
    P['feb5'] = init_feb([fs * 16, fs * 8, fs * 4, fs * 2, fs], out_ch)
    P['feb4'] = init_feb([fs * 8, fs * 4, fs * 2, fs], out_ch)
    P['feb3'] = init_feb([fs * 4, fs * 2, fs], out_ch)
    P['feb2'] = init_feb([fs * 2, fs], out_ch)
    P['out1'] = prep_conv_weight(init_w((out_ch, fs, 1, 1, 1), fs),
                                 jnp.zeros((out_ch,), jnp.float32))
    P['out'] = prep_conv_weight(init_w((out_ch, fs, 1, 1, 1), fs),
                                jnp.zeros((out_ch,), jnp.float32))
    P['msff_w'] = init_w((3,), 3.0)
    return P


# ----------------------------------------------------------------------------
# mstcnet forward
# ----------------------------------------------------------------------------
def mstcnet_forward(x_in, P, out_ch):
    # NCDHW-style (B, C, H, W, D) -> channel-last (B, H, W, D, C)
    x_cl = jnp.transpose(x_in, (0, 2, 3, 4, 1)).astype(jnp.float32)

    hidden = encoder_stub(x_cl, P['enc'])

    enc0 = unet_res_block(x_cl, P['rb0'])
    enc1 = unet_res_block(hidden[0], P['rb1'])
    enc2 = unet_res_block(hidden[1], P['rb2'])
    enc3 = unet_res_block(hidden[2], P['rb3'])
    enc4 = unet_res_block(hidden[3], P['rb4'])
    enc5 = unet_res_block(hidden[4], P['rb5'])

    out5 = feature_extraction_block(enc5, P['feb5'])
    dec3 = unetr_up_block(enc5, enc4, P['up5'])
    out4 = feature_extraction_block(dec3, P['feb4'])
    dec2 = unetr_up_block(dec3, enc3, P['up4'])
    out3 = feature_extraction_block(dec2, P['feb3'])
    dec1 = unetr_up_block(dec2, enc2, P['up3'])
    out2 = feature_extraction_block(dec1, P['feb2'])
    dec0 = unetr_up_block(dec1, enc1, P['up2'])
    out0 = unetr_up_block(dec0, enc0, P['up1'])

    feature5 = out5
    for _ in range(5):
        feature5 = unpool_221_cl(feature5)
    feature4 = out4
    for _ in range(4):
        feature4 = unpool_221_cl(feature4)
    feature3 = out3
    for _ in range(3):
        feature3 = unpool_221_cl(feature3)
    feature2 = out2
    for _ in range(2):
        feature2 = unpool_221_cl(feature2)
    feature1 = unpool_221_cl(conv3d_cl(dec0, P['out1']))
    feature0 = conv3d_cl(out0, P['out'])

    B, H, W, D, C = feature0.shape
    S = H * W * D
    feats_cl = [feature0, feature1, feature2, feature3, feature4, feature5]
    feats_cf = [jnp.transpose(f, (0, 4, 1, 2, 3)) for f in feats_cl]

    if out_ch > 1:
        # batch the MSFF fusion across all (batch, class>=1) pairs in a single kernel call
        stacked = jnp.stack([f.reshape(B, S, C) for f in feats_cl], axis=1)   # (B, 6, S, C)
        sel = jnp.transpose(stacked[..., 1:], (0, 3, 1, 2)).reshape(
            B * (out_ch - 1), 6, S)                                           # (G, 6, S)
        fused = _msff_call(B * (out_ch - 1), S)(sel, P['msff_w'])             # (G, S)
        fused = fused.reshape(B, out_ch - 1, H, W, D)
        final_out = jnp.concatenate([feats_cf[0][:, :1], fused], axis=1)
    else:
        final_out = feats_cf[0]

    return (final_out, feats_cf[0], feats_cf[1], feats_cf[2],
            feats_cf[3], feats_cf[4], feats_cf[5])


# ----------------------------------------------------------------------------
if __name__ == "__main__":
    B, Cin, H, W, D = 2, 1, 32, 32, 4       # img_size=(32,32,4): smallest valid (5x downsample in H,W)
    OUT_C = 4                                # ACDC-style 4 output classes

    params = build_params(Cin, OUT_C, fs=32)
    x_in = jax.random.normal(jax.random.PRNGKey(0), (B, Cin, H, W, D), jnp.float32)

    outs = mstcnet_forward(x_in, params, OUT_C)
    outs = jax.block_until_ready(outs)

    final_out = outs[0]
    assert final_out.shape == (B, OUT_C, H, W, D)
    assert all(o.shape == (B, OUT_C, H, W, D) for o in outs[1:])
    assert all(bool(jnp.all(jnp.isfinite(o))) for o in outs)
    print("KERNEL_OK")
</pallas_src>

<mosaic_0001>
module attributes {stable_mosaic.version = 11 : i64} {
  func.func @_matmul_kernel(%arg0: i32, %arg1: i32, %arg2: memref<128x128xbf16, #tpu.memory_space<vmem>>, %arg3: memref<128x128xbf16, #tpu.memory_space<vmem>>, %arg4: memref<1x128xf32, #tpu.memory_space<vmem>>, %arg5: memref<128x128xf32, #tpu.memory_space<vmem>>, %arg6: memref<128x128xf32, #tpu.memory_space<vmem>>) attributes {dimension_semantics = [#tpu.dimension_semantics<parallel>, #tpu.dimension_semantics<arbitrary>], iteration_bounds = array<i64: 16, 1>, scalar_prefetch = 0 : i64, scratch_operands = 1 : i64, tpu.core_type = #tpu.core_type<tc>, window_params = [{transform_indices = @transform_0, window_bounds = array<i64: 128, 128>}, {transform_indices = @transform_1, window_bounds = array<i64: 128, 128>}, {pipeline_mode = #tpu.pipeline_mode<synchronous>, transform_indices = @transform_2, window_bounds = array<i64: 1, 128>}, {transform_indices = @transform_3, window_bounds = array<i64: 128, 128>}]} {
    %c0_i32 = arith.constant 0 : i32
    %0 = arith.cmpi eq, %arg1, %c0_i32 : i32
    %1 = arith.extui %0 : i1 to i32
    %c0_i32_0 = arith.constant 0 : i32
    %2 = arith.cmpi ne, %1, %c0_i32_0 : i32
    scf.if %2 {
      %cst_10 = arith.constant 0.000000e+00 : f32
      %12 = vector.broadcast %cst_10 : f32 to vector<128x128xf32>
      %c0_11 = arith.constant 0 : index
      %c0_12 = arith.constant 0 : index
      %13 = vector.load %arg6[%c0_11, %c0_12] : memref<128x128xf32, #tpu.memory_space<vmem>>, vector<128x128xf32>
      tpu.vector_store %arg6[%c0_11, %c0_12], %12 {strides = array<i32>} : memref<128x128xf32, #tpu.memory_space<vmem>>, vector<128x128xf32>,
    } else {
    }
    %c0 = arith.constant 0 : index
    %c0_1 = arith.constant 0 : index
    %3 = vector.load %arg6[%c0, %c0_1] : memref<128x128xf32, #tpu.memory_space<vmem>>, vector<128x128xf32>
    %c0_2 = arith.constant 0 : index
    %c0_3 = arith.constant 0 : index
    %4 = vector.load %arg2[%c0_2, %c0_3] : memref<128x128xbf16, #tpu.memory_space<vmem>>, vector<128x128xbf16>
    %c0_4 = arith.constant 0 : index
    %c0_5 = arith.constant 0 : index
    %5 = vector.load %arg3[%c0_4, %c0_5] : memref<128x128xbf16, #tpu.memory_space<vmem>>, vector<128x128xbf16>
    %cst = arith.constant dense<0.000000e+00> : vector<128x128xf32>
    %6 = tpu.matmul %4, %5, %cst {dimension_numbers = #tpu.dot_dimension_numbers<[1], [0], [0], [1], [0, 0, 1, 1], [], []>} : vector<128x128xbf16>, vector<128x128xbf16>, vector<128x128xf32> -> vector<128x128xf32>
    %7 = arith.addf %3, %6 : vector<128x128xf32>
    %c0_6 = arith.constant 0 : index
    %c0_7 = arith.constant 0 : index
    %8 = vector.load %arg6[%c0_6, %c0_7] : memref<128x128xf32, #tpu.memory_space<vmem>>, vector<128x128xf32>
    tpu.vector_store %arg6[%c0_6, %c0_7], %7 {strides = array<i32>} : memref<128x128xf32, #tpu.memory_space<vmem>>, vector<128x128xf32>,
    %c0_i32_8 = arith.constant 0 : i32
    %9 = arith.cmpi eq, %arg1, %c0_i32_8 : i32
    %10 = arith.extui %9 : i1 to i32
    %c0_i32_9 = arith.constant 0 : i32
    %11 = arith.cmpi ne, %10, %c0_i32_9 : i32
    scf.if %11 {
      %c0_10 = arith.constant 0 : index
      %c0_11 = arith.constant 0 : index
      %12 = vector.load %arg6[%c0_10, %c0_11] : memref<128x128xf32, #tpu.memory_space<vmem>>, vector<128x128xf32>
      %c0_12 = arith.constant 0 : index
      %c0_13 = arith.constant 0 : index
      %13 = vector.load %arg4[%c0_12, %c0_13] : memref<1x128xf32, #tpu.memory_space<vmem>>, vector<1x128xf32>
      %14 = vector.broadcast %13 : vector<1x128xf32> to vector<128x128xf32>
      %15 = arith.addf %12, %14 : vector<128x128xf32>
      %c0_14 = arith.constant 0 : index
      %c0_15 = arith.constant 0 : index
      %16 = vector.load %arg5[%c0_14, %c0_15] : memref<128x128xf32, #tpu.memory_space<vmem>>, vector<128x128xf32>
      tpu.vector_store %arg5[%c0_14, %c0_15], %15 {strides = array<i32>} : memref<128x128xf32, #tpu.memory_space<vmem>>, vector<128x128xf32>,
    } else {
    }
    return
  }
  func.func @transform_0(%arg0: i32, %arg1: i32) -> (i32, i32) {
    %c0_i32 = arith.constant 0 : i32
    return %arg0, %arg1 : i32, i32
  }
  func.func @transform_1(%arg0: i32, %arg1: i32) -> (i32, i32) {
    %c0_i32 = arith.constant 0 : i32
    %c0_i32_0 = arith.constant 0 : i32
    return %arg1, %c0_i32 : i32, i32
  }
  func.func @transform_2(%arg0: i32, %arg1: i32) -> (i32, i32) {
    %c0_i32 = arith.constant 0 : i32
    %c0_i32_0 = arith.constant 0 : i32
    %c0_i32_1 = arith.constant 0 : i32
    return %c0_i32, %c0_i32_0 : i32, i32
  }
  func.func @transform_3(%arg0: i32, %arg1: i32) -> (i32, i32) {
    %c0_i32 = arith.constant 0 : i32
    %c0_i32_0 = arith.constant 0 : i32
    return %arg0, %c0_i32 : i32, i32
  }
}

</mosaic_0001>

<llo_original>
// kernel: tpu_custom_call.1
$region0: #{tpu_custom_call.1}
  #allocation0 [shape = 'u32[]', space=smem, size = 0x4, offset = 0x4, fixed_abs, tag = 'smem constant byte address 0x4 - core index']
  #allocation1 [shape = 'u32[72,128]{1,0:T(1,128)}', space=vmem, size = 0x9000, scoped, tag = 'internal scratch']
  #allocation2 [shape = 'f32[128,128]{1,0:T(8,128)}', space=vmem, size = 0x10000, scoped, tag = 'scratch operand']
  %s0 = inlined_call_operand.hbm [shape: bf16[2048,128], index: 0, kind: input, shape index: {}]
  %s1 = inlined_call_operand.hbm [shape: bf16[128,128], index: 1, kind: input, shape index: {}]
  %s2 = inlined_call_operand.vmem [shape: f32[1,128], index: 2, kind: input, shape index: {}]
  %s3 = inlined_call_operand.hbm [shape: f32[2048,128], index: 3, kind: output, shape index: {}]
  %s4 = sld [smem:[#allocation0]]
  $region61: #{tpu_custom_call.1} parent=0
    _
  %s6 = ssub.s32 1, %s4
  %s7 = scalar_select 0, %s6, %s4
  $region1: #{tpu_custom_call.1} parent=0
    #allocation3 [shape = 'u8[65536]{0}', space=vmem, size = 0x10000, scoped, tag = 'input window, operand 0']
    #allocation4 [shape = 's32[2]{0}', space=sflag, size = 0x8, scoped, tag = 'scoped memory for tpu_custom_call.1']
    #allocation5 [shape = 's32[2]{0}', space=sflag, size = 0x8, scoped, tag = 'scoped memory for tpu_custom_call.1']
    #allocation6 [shape = 'u8[32768]{0}', space=vmem, size = 0x8000, scoped, tag = 'input window, operand 1, single buffered']
    #allocation7 [shape = 's32[1]{0}', space=sflag, size = 0x4, scoped, tag = 'scoped memory for tpu_custom_call.1']
    #allocation8 [shape = 'u8[131072]{0}', space=vmem, size = 0x20000, scoped, tag = 'output window, operand 0']
    %8 = vsyncpa [#allocation4], 0
    %s9 = scalar_lea.sflag [#allocation4], 1
    %10 = vsyncpa %s9, 0
    %11 = vsyncpa [#allocation7], 0
    %12 = vsyncpa [#allocation5], 0
    %s13 = scalar_lea.sflag [#allocation5], 1
    %14 = vsyncpa %s13, 0
    loop: start=0, step=1, limit=18
    $region2: #{tpu_custom_call.1} parent=1 // loop_pre_header
      _
    $region3: #{tpu_custom_call.1} parent=1 // loop_header
      %s16 = sphi 0, %s20
      %p17 = scmp.ge.s32.totalorder %s16, 18
      %s23 = sphi 0, %s35
      %s24 = sphi 0, %s31
      %s25 = sphi 0, %s23
      %s26 = sphi 0, %s24
      %s27 = sphi 0, %s25
      %s28 = sphi 0, %s26
      %s40 = sphi 0, %s42
      %s43 = sphi 0, %s40
      %s44 = sphi 0, %s43
      %s60 = sphi 0, %s44
      %s66 = sphi 0, %s68
      %s69 = sphi 0, %s66
      %s70 = sphi 0, %s69
      %s86 = sphi 0, %s70
      %s90 = sphi 0, %s90
      %s92 = sphi 0, %s90
      %s93 = sphi 0, %s92
      %s107 = sphi 0, %s93
      %s113 = sphi 0, %s115
      %s116 = sphi 0, %s113
      %s117 = sphi 0, %s116
      %s133 = sphi 0, %s117
    $region4: #{tpu_custom_call.1} parent=1 // loop_header_branch
      %19 = sbr.rel (%p17) target = $region8
    $region5: #{tpu_custom_call.1} parent=1 // loop_body
      %s21 = ssub.s32 %s16, 1
      %s22 = ssub.s32 %s16, 2
      %s29 = sadd.s32 1, %s24
      %p30 = scmp.ge.s32.totalorder %s29, 1
      %s31 = scalar_select %p30, 0, %s29
      %s32 = sadd.s32 1, %s23
      %s33 = scalar_select %p30, %s32, %s23
      %p34 = scmp.ge.s32.totalorder %s33, 16
      %s35 = scalar_select %p34, 0, %s33
      %s36 = ssub.s32 %s23, %s35
      %s37 = ssub.s32 %s24, %s31
      %s38 = sor.u32 %s36, %s37
      %p39 = scmp.eq.s32.totalorder %s38, 0
      %s41 = sadd.s32 %s40, 1
      %s42 = scalar_select %p39, %s40, %s41
      %p45 = pneg %p39
      %p46 = scmp.eq.s32.totalorder %s16, 15
      %p47 = por %p45, %p46
      %p48 = scmp.ne.s32.totalorder %s40, %s43
      %p49 = scmp.eq.s32.totalorder %s16, 0
      %p50 = por %p48, %p49
      %p51 = scmp.ne.s32.totalorder %s40, %s43
      %p52 = scmp.eq.s32.totalorder %s21, 15
      %p53 = por %p51, %p52
      %p54 = scmp.ne.s32.totalorder %s43, %s44
      %p55 = scmp.eq.s32.totalorder %s21, 0
      %p56 = por %p54, %p55
      %p57 = scmp.ne.s32.totalorder %s43, %s44
      %p58 = scmp.eq.s32.totalorder %s22, 15
      %p59 = por %p57, %p58
      %p61 = scmp.ne.s32.totalorder %s44, %s60
      %p62 = scmp.eq.s32.totalorder %s22, 0
      %p63 = por %p61, %p62
      %s64 = ssub.s32 %s24, %s31
      %p65 = scmp.eq.s32.totalorder %s64, 0
      %s67 = sadd.s32 %s66, 1
      %s68 = scalar_select %p65, %s66, %s67
      %p71 = pneg %p65
      %p72 = scmp.eq.s32.totalorder %s16, 15
      %p73 = por %p71, %p72
      %p74 = scmp.ne.s32.totalorder %s66, %s69
      %p75 = scmp.eq.s32.totalorder %s16, 0
      %p76 = por %p74, %p75
      %p77 = scmp.ne.s32.totalorder %s66, %s69
      %p78 = scmp.eq.s32.totalorder %s21, 15
      %p79 = por %p77, %p78
      %p80 = scmp.ne.s32.totalorder %s69, %s70
      %p81 = scmp.eq.s32.totalorder %s21, 0
      %p82 = por %p80, %p81
      %p83 = scmp.ne.s32.totalorder %s69, %s70
      %p84 = scmp.eq.s32.totalorder %s22, 15
      %p85 = por %p83, %p84
      %p87 = scmp.ne.s32.totalorder %s70, %s86
      %p88 = scmp.eq.s32.totalorder %s22, 0
      %p89 = por %p87, %p88
      %s91 = sadd.s32 %s90, 1
      %p94 = scmp.eq.s32.totalorder %s16, 15
      %p95 = scmp.ne.s32.totalorder %s90, %s92
      %p96 = scmp.eq.s32.totalorder %s16, 0
      %p97 = por %p95, %p96
      %p98 = scmp.ne.s32.totalorder %s90, %s92
      %p99 = scmp.eq.s32.totalorder %s21, 15
      %p100 = por %p98, %p99
      %p101 = scmp.ne.s32.totalorder %s92, %s93
      %p102 = scmp.eq.s32.totalorder %s21, 0
      %p103 = por %p101, %p102
      %p104 = scmp.ne.s32.totalorder %s92, %s93
      %p105 = scmp.eq.s32.totalorder %s22, 15
      %p106 = por %p104, %p105
      %p108 = scmp.ne.s32.totalorder %s93, %s107
      %p109 = scmp.eq.s32.totalorder %s22, 0
      %p110 = por %p108, %p109
      %s111 = ssub.s32 %s23, %s35
      %p112 = scmp.eq.s32.totalorder %s111, 0
      %s114 = sadd.s32 %s113, 1
      %s115 = scalar_select %p112, %s113, %s114
      %p118 = pneg %p112
      %p119 = scmp.eq.s32.totalorder %s16, 15
      %p120 = por %p118, %p119
      %p121 = scmp.ne.s32.totalorder %s113, %s116
      %p122 = scmp.eq.s32.totalorder %s16, 0
      %p123 = por %p121, %p122
      %p124 = scmp.ne.s32.totalorder %s113, %s116
      %p125 = scmp.eq.s32.totalorder %s21, 15
      %p126 = por %p124, %p125
      %p127 = scmp.ne.s32.totalorder %s116, %s117
      %p128 = scmp.eq.s32.totalorder %s21, 0
      %p129 = por %p127, %p128
      %p130 = scmp.ne.s32.totalorder %s116, %s117
      %p131 = scmp.eq.s32.totalorder %s22, 15
      %p132 = por %p130, %p131
      %p134 = scmp.ne.s32.totalorder %s117, %s133
      %p135 = scmp.eq.s32.totalorder %s22, 0
      %p136 = por %p134, %p135
      %p137 = scmp.le.s32.totalorder 1, %s16
      %p138 = scmp.lt.s32.totalorder %s16, 17
      %p139 = pnand %p137, %p138
      %p140 = pneg %p139
      // Predicated region
      $region9: #{tpu_custom_call.1} parent=5 // pred_check
        _
      $region10: #{tpu_custom_call.1} parent=5 // pred_check_branch
        %142 = sbr.rel (%p139) target = $region12
      $region11: #{tpu_custom_call.1} parent=5 // pred_region
        %s143 = ssub.s32 %s16, 1
        // Predicated region
        $region13: #{tpu_custom_call.1} parent=11 // pred_check
          %p144 = pneg %p82
        $region14: #{tpu_custom_call.1} parent=11 // pred_check_branch
          %146 = sbr.rel (%p144) target = $region16
        $region15: #{tpu_custom_call.1} parent=11 // pred_region
          %s147 = smul.u32 16, %s26
          %149 = vsyncadd [#allocation7], 0
          %s150 = smul.addr %s147, 4
          %s151 = scalar_lea.hbm %s1, %s150
          %s152 = sshll.u32 %s151, 4
          %s153 = int_to_ptr.hbm [resolvable:$true] %s152
          %s154 = sshll.u32 [#allocation6], 4
          %s155 = int_to_ptr.vmem [resolvable:$true] %s154
          %160 = dma.hbm_to_vmem [thread:$0]  %s153, 1024, %s155, [#allocation7], 64, 64, 4
        $region16: #{tpu_custom_call.1} parent=11 // pred_fallthru
          _
        // Predicated region
        $region17: #{tpu_custom_call.1} parent=11 // pred_check
          %p161 = pneg %p103
        $region18: #{tpu_custom_call.1} parent=11 // pred_check_branch
          %163 = sbr.rel (%p161) target = $region20
        $region19: #{tpu_custom_call.1} parent=11 // pred_region
          _
        $region20: #{tpu_custom_call.1} parent=11 // pred_fallthru
          _
      $region12: #{tpu_custom_call.1} parent=5 // pred_fallthru
        _
      %p164 = scmp.lt.s32.totalorder %s16, 16
      // Predicated region
      $region21: #{tpu_custom_call.1} parent=5 // pred_check
        %p165 = pneg %p164
      $region22: #{tpu_custom_call.1} parent=5 // pred_check_branch
        %167 = sbr.rel (%p165) target = $region24
      $region23: #{tpu_custom_call.1} parent=5 // pred_region
        // Predicated region
        $region25: #{tpu_custom_call.1} parent=23 // pred_check
          %p168 = pneg %p50
        $region26: #{tpu_custom_call.1} parent=23 // pred_check_branch
          %170 = sbr.rel (%p168) target = $region28
        $region27: #{tpu_custom_call.1} parent=23 // pred_region
          %s171 = sand.u32 %s40, 1
          %s172 = scalar_lea.sflag [#allocation4], %s171
          %s173 = sand.u32 %s40, 1
          %s174 = smul.addr %s173, 64
          %s175 = scalar_lea.vmem [#allocation3], %s174
          %s176 = smul.u32 16, %s23
          %178 = vsyncadd %s172, 0
          %s179 = sadd.s32 %s24, %s176
          %s180 = smul.addr %s179, 4
          %s181 = scalar_lea.hbm %s0, %s180
          %s182 = sshll.u32 %s181, 4
          %s183 = int_to_ptr.hbm [resolvable:$true] %s182
          %s184 = sshll.u32 %s175, 4
          %s185 = int_to_ptr.vmem [resolvable:$true] %s184
          %190 = dma.hbm_to_vmem [thread:$0]  %s183, 1024, %s185, %s172, 64, 64, 4
        $region28: #{tpu_custom_call.1} parent=23 // pred_fallthru
          _
      $region24: #{tpu_custom_call.1} parent=5 // pred_fallthru
        _
      %p191 = scmp.le.s32.totalorder 1, %s16
      %p192 = scmp.lt.s32.totalorder %s16, 17
      %p193 = pnand %p191, %p192
      %p194 = pneg %p193
      // Predicated region
      $region29: #{tpu_custom_call.1} parent=5 // pred_check
        _
      $region30: #{tpu_custom_call.1} parent=5 // pred_check_branch
        %196 = sbr.rel (%p193) target = $region32
      $region31: #{tpu_custom_call.1} parent=5 // pred_region
        %s197 = ssub.s32 %s16, 1
        %s198 = sand.u32 %s43, 1
        %s199 = scalar_lea.sflag [#allocation4], %s198
        %s200 = sand.u32 %s43, 1
        %s201 = smul.addr %s200, 64
        %s202 = scalar_lea.vmem [#allocation3], %s201
        // Predicated region
        $region33: #{tpu_custom_call.1} parent=31 // pred_check
          %p203 = pneg %p56
        $region34: #{tpu_custom_call.1} parent=31 // pred_check_branch
          %205 = sbr.rel (%p203) target = $region36
        $region35: #{tpu_custom_call.1} parent=31 // pred_region
          %207 = dma.done %s199, 1024
        $region36: #{tpu_custom_call.1} parent=31 // pred_fallthru
          _
        // Predicated region
        $region37: #{tpu_custom_call.1} parent=31 // pred_check
          %p208 = pneg %p82
        $region38: #{tpu_custom_call.1} parent=31 // pred_check_branch
          %210 = sbr.rel (%p208) target = $region40
        $region39: #{tpu_custom_call.1} parent=31 // pred_region
          %212 = dma.done [#allocation7], 1024
        $region40: #{tpu_custom_call.1} parent=31 // pred_fallthru
          _
        %s213 = sand.u32 %s43, 1
        %s214 = scalar_lea.sflag [#allocation4], %s213
        %s215 = sand.u32 %s43, 1
        %s216 = smul.addr %s215, 64
        %s217 = scalar_lea.vmem [#allocation3], %s216
        %p218 = pneg %p56
        %p219 = pneg %p53
        %p220 = pneg %p82
        %p221 = pneg %p79
        %p222 = pneg %p103
        %p223 = pneg %p100
        %p224 = pneg %p129
        %p225 = pneg %p126
        %s226 = sand.u32 %s116, 1
        %s227 = scalar_lea.sflag [#allocation5], %s226
        %s228 = sand.u32 %s116, 1
        %s229 = smul.addr %s228, 128
        %s230 = scalar_lea.vmem [#allocation8], %s229
        %s231 = smul.u32 16, %s25
        %s232 = smul.u32 16, %s26
        %s233 = smul.u32 16, %s25
        %p234 = scmp.eq.s32.totalorder %s26, 0
        // Predicated region
        $region41: #{tpu_custom_call.1} parent=31 // pred_check
          %p235 = pneg %p234
        $region42: #{tpu_custom_call.1} parent=31 // pred_check_branch
          %237 = sbr.rel (%p235) target = $region44
        $region43: #{tpu_custom_call.1} parent=31 // pred_region
          %238 = vst [vmem:[#allocation2] sm:$0xff] 0.0
          %239 = vst [vmem:[#allocation2 + $0x8] sm:$0xff] 0.0
          %240 = vst [vmem:[#allocation2 + $0x10] sm:$0xff] 0.0
          %241 = vst [vmem:[#allocation2 + $0x18] sm:$0xff] 0.0
          %242 = vst [vmem:[#allocation2 + $0x20] sm:$0xff] 0.0
          %243 = vst [vmem:[#allocation2 + $0x28] sm:$0xff] 0.0
          %244 = vst [vmem:[#allocation2 + $0x30] sm:$0xff] 0.0
          %245 = vst [vmem:[#allocation2 + $0x38] sm:$0xff] 0.0
          %246 = vst [vmem:[#allocation2 + $0x40] sm:$0xff] 0.0
          %247 = vst [vmem:[#allocation2 + $0x48] sm:$0xff] 0.0
          %248 = vst [vmem:[#allocation2 + $0x50] sm:$0xff] 0.0
          %249 = vst [vmem:[#allocation2 + $0x58] sm:$0xff] 0.0
          %250 = vst [vmem:[#allocation2 + $0x60] sm:$0xff] 0.0
          %251 = vst [vmem:[#allocation2 + $0x68] sm:$0xff] 0.0
          %252 = vst [vmem:[#allocation2 + $0x70] sm:$0xff] 0.0
          %253 = vst [vmem:[#allocation2 + $0x78] sm:$0xff] 0.0
        $region44: #{tpu_custom_call.1} parent=31 // pred_fallthru
          _
        %v254 = vld [vmem:[#allocation2] sm:$0xff]
        %v255 = vld [vmem:[#allocation2 + $0x8] sm:$0xff]
        %v256 = vld [vmem:[#allocation2 + $0x10] sm:$0xff]
        %v257 = vld [vmem:[#allocation2 + $0x18] sm:$0xff]
        %v258 = vld [vmem:[#allocation2 + $0x20] sm:$0xff]
        %v259 = vld [vmem:[#allocation2 + $0x28] sm:$0xff]
        %v260 = vld [vmem:[#allocation2 + $0x30] sm:$0xff]
        %v261 = vld [vmem:[#allocation2 + $0x38] sm:$0xff]
        %v262 = vld [vmem:[#allocation2 + $0x40] sm:$0xff]
        %v263 = vld [vmem:[#allocation2 + $0x48] sm:$0xff]
        %v264 = vld [vmem:[#allocation2 + $0x50] sm:$0xff]
        %v265 = vld [vmem:[#allocation2 + $0x58] sm:$0xff]
        %v266 = vld [vmem:[#allocation2 + $0x60] sm:$0xff]
        %v267 = vld [vmem:[#allocation2 + $0x68] sm:$0xff]
        %v268 = vld [vmem:[#allocation2 + $0x70] sm:$0xff]
        %v269 = vld [vmem:[#allocation2 + $0x78] sm:$0xff]
        %v270 = vld [vmem:[%s202] sm:$0xf]
        %v271 = vld [vmem:[%s202 + $0x4] sm:$0xf]
        %v272 = vld [vmem:[%s202 + $0x8] sm:$0xf]
        %v273 = vld [vmem:[%s202 + $0xc] sm:$0xf]
        %v274 = vld [vmem:[%s202 + $0x10] sm:$0xf]
        %v275 = vld [vmem:[%s202 + $0x14] sm:$0xf]
        %v276 = vld [vmem:[%s202 + $0x18] sm:$0xf]
        %v277 = vld [vmem:[%s202 + $0x1c] sm:$0xf]
        %v278 = vld [vmem:[%s202 + $0x20] sm:$0xf]
        %v279 = vld [vmem:[%s202 + $0x24] sm:$0xf]
        %v280 = vld [vmem:[%s202 + $0x28] sm:$0xf]
        %v281 = vld [vmem:[%s202 + $0x2c] sm:$0xf]
        %v282 = vld [vmem:[%s202 + $0x30] sm:$0xf]
        %v283 = vld [vmem:[%s202 + $0x34] sm:$0xf]
        %v284 = vld [vmem:[%s202 + $0x38] sm:$0xf]
        %v285 = vld [vmem:[%s202 + $0x3c] sm:$0xf]
        %v286 = vld [vmem:[#allocation6] sm:$0xf]
        %v287 = vld [vmem:[#allocation6 + $0x4] sm:$0xf]
        %v288 = vld [vmem:[#allocation6 + $0x8] sm:$0xf]
        %v289 = vld [vmem:[#allocation6 + $0xc] sm:$0xf]
        %v290 = vld [vmem:[#allocation6 + $0x10] sm:$0xf]
        %v291 = vld [vmem:[#allocation6 + $0x14] sm:$0xf]
        %v292 = vld [vmem:[#allocation6 + $0x18] sm:$0xf]
        %v293 = vld [vmem:[#allocation6 + $0x1c] sm:$0xf]
        %v294 = vld [vmem:[#allocation6 + $0x20] sm:$0xf]
        %v295 = vld [vmem:[#allocation6 + $0x24] sm:$0xf]
        %v296 = vld [vmem:[#allocation6 + $0x28] sm:$0xf]
        %v297 = vld [vmem:[#allocation6 + $0x2c] sm:$0xf]
        %v298 = vld [vmem:[#allocation6 + $0x30] sm:$0xf]
        %v299 = vld [vmem:[#allocation6 + $0x34] sm:$0xf]
        %v300 = vld [vmem:[#allocation6 + $0x38] sm:$0xf]
        %v301 = vld [vmem:[#allocation6 + $0x3c] sm:$0xf]
        %v318 = vunpack.c.l.b16 %v270
        %v319 = vunpack.c.l.b16 %v271
        %v320 = vunpack.c.l.b16 %v272
        %v321 = vunpack.c.l.b16 %v273
        %v322 = vunpack.c.l.b16 %v274
        %v323 = vunpack.c.l.b16 %v275
        %v324 = vunpack.c.l.b16 %v276
        %v325 = vunpack.c.l.b16 %v277
        %v326 = vunpack.c.l.b16 %v278
        %v327 = vunpack.c.l.b16 %v279
        %v328 = vunpack.c.l.b16 %v280
        %v329 = vunpack.c.l.b16 %v281
        %v330 = vunpack.c.l.b16 %v282
        %v331 = vunpack.c.l.b16 %v283
        %v332 = vunpack.c.l.b16 %v284
        %v333 = vunpack.c.l.b16 %v285
        %v334 = vpack.c.b16 %v319, %v318
        %v335 = vpack.c.b16 %v321, %v320
        %v336 = vpack.c.b16 %v323, %v322
        %v337 = vpack.c.b16 %v325, %v324
        %v338 = vpack.c.b16 %v327, %v326
        %v339 = vpack.c.b16 %v329, %v328
        %v340 = vpack.c.b16 %v331, %v330
        %v341 = vpack.c.b16 %v333, %v332
        %v366 = vunpack.c.l.b16 %v286
        %v367 = vunpack.c.l.b16 %v287
        %v368 = vunpack.c.l.b16 %v288
        %v369 = vunpack.c.l.b16 %v289
        %v370 = vunpack.c.l.b16 %v290
        %v371 = vunpack.c.l.b16 %v291
        %v372 = vunpack.c.l.b16 %v292
        %v373 = vunpack.c.l.b16 %v293
        %v374 = vunpack.c.l.b16 %v294
        %v375 = vunpack.c.l.b16 %v295
        %v376 = vunpack.c.l.b16 %v296
        %v377 = vunpack.c.l.b16 %v297
        %v378 = vunpack.c.l.b16 %v298
        %v379 = vunpack.c.l.b16 %v299
        %v380 = vunpack.c.l.b16 %v300
        %v381 = vunpack.c.l.b16 %v301
        %v382 = vpack.c.b16 %v367, %v366
        %v383 = vpack.c.b16 %v369, %v368
        %v384 = vpack.c.b16 %v371, %v370
        %v385 = vpack.c.b16 %v373, %v372
        %v386 = vpack.c.b16 %v375, %v374
        %v387 = vpack.c.b16 %v377, %v376
        %v388 = vpack.c.b16 %v379, %v378
        %v389 = vpack.c.b16 %v381, %v380
        %398 = vmatpush.bf16.msra.mxu0 %v389
        %399 = vmatpush.bf16.msra.mxu0 %v388
        %400 = vmatpush.bf16.msra.mxu0 %v387
        %401 = vmatpush.bf16.msra.mxu0 %v386
        %402 = vmatpush.bf16.msra.mxu0 %v385
        %403 = vmatpush.bf16.msra.mxu0 %v384
        %404 = vmatpush.bf16.msra.mxu0 %v383
        %405 = vmatpush.bf16.msra.mxu0 %v382
        %406 = vmatmul.bf16.gmra.mxu0 %v334
        %v407 = vpop.f32.mrf.mxu0
        %v408 = vadd.f32 0.0, %v407
        %v409 = vpop.f32.mrf.mxu0
        %v410 = vadd.f32 0.0, %v409
        %411 = vmatmul.bf16.gmra.mxu0 %v335
        %v412 = vpop.f32.mrf.mxu0
        %v413 = vadd.f32 0.0, %v412
        %v414 = vpop.f32.mrf.mxu0
        %v415 = vadd.f32 0.0, %v414
        %416 = vmatmul.bf16.gmra.mxu0 %v336
        %v417 = vpop.f32.mrf.mxu0
        %v418 = vadd.f32 0.0, %v417
        %v419 = vpop.f32.mrf.mxu0
        %v420 = vadd.f32 0.0, %v419
        %421 = vmatmul.bf16.gmra.mxu0 %v337
        %v422 = vpop.f32.mrf.mxu0
        %v423 = vadd.f32 0.0, %v422
        %v424 = vpop.f32.mrf.mxu0
        %v425 = vadd.f32 0.0, %v424
        %426 = vmatmul.bf16.gmra.mxu0 %v338
        %v427 = vpop.f32.mrf.mxu0
        %v428 = vadd.f32 0.0, %v427
        %v429 = vpop.f32.mrf.mxu0
        %v430 = vadd.f32 0.0, %v429
        %431 = vmatmul.bf16.gmra.mxu0 %v339
        %v432 = vpop.f32.mrf.mxu0
        %v433 = vadd.f32 0.0, %v432
        %v434 = vpop.f32.mrf.mxu0
        %v435 = vadd.f32 0.0, %v434
        %436 = vmatmul.bf16.gmra.mxu0 %v340
        %v437 = vpop.f32.mrf.mxu0
        %v438 = vadd.f32 0.0, %v437
        %v439 = vpop.f32.mrf.mxu0
        %v440 = vadd.f32 0.0, %v439
        %441 = vmatmul.bf16.gmra.mxu0 %v341
        %v442 = vpop.f32.mrf.mxu0
        %v443 = vadd.f32 0.0, %v442
        %v444 = vpop.f32.mrf.mxu0
        %v445 = vadd.f32 0.0, %v444
        %446 = vdwg.mxu0
        %v447 = vadd.f32 %v254, %v408
        %v448 = vadd.f32 %v255, %v410
        %v449 = vadd.f32 %v256, %v413
        %v450 = vadd.f32 %v257, %v415
        %v451 = vadd.f32 %v258, %v418
        %v452 = vadd.f32 %v259, %v420
        %v453 = vadd.f32 %v260, %v423
        %v454 = vadd.f32 %v261, %v425
        %v455 = vadd.f32 %v262, %v428
        %v456 = vadd.f32 %v263, %v430
        %v457 = vadd.f32 %v264, %v433
        %v458 = vadd.f32 %v265, %v435
        %v459 = vadd.f32 %v266, %v438
        %v460 = vadd.f32 %v267, %v440
        %v461 = vadd.f32 %v268, %v443
        %v462 = vadd.f32 %v269, %v445
        %463 = vst [vmem:[#allocation2] sm:$0xff] %v447
        %464 = vst [vmem:[#allocation2 + $0x8] sm:$0xff] %v448
        %465 = vst [vmem:[#allocation2 + $0x10] sm:$0xff] %v449
        %466 = vst [vmem:[#allocation2 + $0x18] sm:$0xff] %v450
        %467 = vst [vmem:[#allocation2 + $0x20] sm:$0xff] %v451
        %468 = vst [vmem:[#allocation2 + $0x28] sm:$0xff] %v452
        %469 = vst [vmem:[#allocation2 + $0x30] sm:$0xff] %v453
        %470 = vst [vmem:[#allocation2 + $0x38] sm:$0xff] %v454
        %471 = vst [vmem:[#allocation2 + $0x40] sm:$0xff] %v455
        %472 = vst [vmem:[#allocation2 + $0x48] sm:$0xff] %v456
        %473 = vst [vmem:[#allocation2 + $0x50] sm:$0xff] %v457
        %474 = vst [vmem:[#allocation2 + $0x58] sm:$0xff] %v458
        %475 = vst [vmem:[#allocation2 + $0x60] sm:$0xff] %v459
        %476 = vst [vmem:[#allocation2 + $0x68] sm:$0xff] %v460
        %477 = vst [vmem:[#allocation2 + $0x70] sm:$0xff] %v461
        %478 = vst [vmem:[#allocation2 + $0x78] sm:$0xff] %v462
        // Predicated region
        $region45: #{tpu_custom_call.1} parent=31 // pred_check
          %p479 = pneg %p234
        $region46: #{tpu_custom_call.1} parent=31 // pred_check_branch
          %481 = sbr.rel (%p479) target = $region48
        $region47: #{tpu_custom_call.1} parent=31 // pred_region
          %v482 = vld [vmem:[#allocation2] sm:$0xff]
          %v483 = vld [vmem:[#allocation2 + $0x8] sm:$0xff]
          %v484 = vld [vmem:[#allocation2 + $0x10] sm:$0xff]
          %v485 = vld [vmem:[#allocation2 + $0x18] sm:$0xff]
          %v486 = vld [vmem:[#allocation2 + $0x20] sm:$0xff]
          %v487 = vld [vmem:[#allocation2 + $0x28] sm:$0xff]
          %v488 = vld [vmem:[#allocation2 + $0x30] sm:$0xff]
          %v489 = vld [vmem:[#allocation2 + $0x38] sm:$0xff]
          %v490 = vld [vmem:[#allocation2 + $0x40] sm:$0xff]
          %v491 = vld [vmem:[#allocation2 + $0x48] sm:$0xff]
          %v492 = vld [vmem:[#allocation2 + $0x50] sm:$0xff]
          %v493 = vld [vmem:[#allocation2 + $0x58] sm:$0xff]
          %v494 = vld [vmem:[#allocation2 + $0x60] sm:$0xff]
          %v495 = vld [vmem:[#allocation2 + $0x68] sm:$0xff]
          %v496 = vld [vmem:[#allocation2 + $0x70] sm:$0xff]
          %v497 = vld [vmem:[#allocation2 + $0x78] sm:$0xff]
          %v498 = vld [vmem:[%s2] sm:$0x1]
          %v500 = vperm.slane %v498, 0
          %v502 = vadd.f32 %v482, %v500
          %v503 = vadd.f32 %v483, %v500
          %v504 = vadd.f32 %v484, %v500
          %v505 = vadd.f32 %v485, %v500
          %v506 = vadd.f32 %v486, %v500
          %v507 = vadd.f32 %v487, %v500
          %v508 = vadd.f32 %v488, %v500
          %v509 = vadd.f32 %v489, %v500
          %v510 = vadd.f32 %v490, %v500
          %v511 = vadd.f32 %v491, %v500
          %v512 = vadd.f32 %v492, %v500
          %v513 = vadd.f32 %v493, %v500
          %v514 = vadd.f32 %v494, %v500
          %v515 = vadd.f32 %v495, %v500
          %v516 = vadd.f32 %v496, %v500
          %v517 = vadd.f32 %v497, %v500
          %518 = vst [vmem:[%s230] sm:$0xff] %v502
          %519 = vst [vmem:[%s230 + $0x8] sm:$0xff] %v503
          %520 = vst [vmem:[%s230 + $0x10] sm:$0xff] %v504
          %521 = vst [vmem:[%s230 + $0x18] sm:$0xff] %v505
          %522 = vst [vmem:[%s230 + $0x20] sm:$0xff] %v506
          %523 = vst [vmem:[%s230 + $0x28] sm:$0xff] %v507
          %524 = vst [vmem:[%s230 + $0x30] sm:$0xff] %v508
          %525 = vst [vmem:[%s230 + $0x38] sm:$0xff] %v509
          %526 = vst [vmem:[%s230 + $0x40] sm:$0xff] %v510
          %527 = vst [vmem:[%s230 + $0x48] sm:$0xff] %v511
          %528 = vst [vmem:[%s230 + $0x50] sm:$0xff] %v512
          %529 = vst [vmem:[%s230 + $0x58] sm:$0xff] %v513
          %530 = vst [vmem:[%s230 + $0x60] sm:$0xff] %v514
          %531 = vst [vmem:[%s230 + $0x68] sm:$0xff] %v515
          %532 = vst [vmem:[%s230 + $0x70] sm:$0xff] %v516
          %533 = vst [vmem:[%s230 + $0x78] sm:$0xff] %v517
        $region48: #{tpu_custom_call.1} parent=31 // pred_fallthru
          _
        %s534 = sand.u32 %s116, 1
        %s535 = scalar_lea.sflag [#allocation5], %s534
        %s536 = sand.u32 %s116, 1
        %s537 = smul.addr %s536, 128
        %s538 = scalar_lea.vmem [#allocation8], %s537
        // Predicated region
        $region49: #{tpu_custom_call.1} parent=31 // pred_check
          %p539 = pneg %p126
        $region50: #{tpu_custom_call.1} parent=31 // pred_check_branch
          %541 = sbr.rel (%p539) target = $region52
        $region51: #{tpu_custom_call.1} parent=31 // pred_region
          %s542 = smul.u32 16, %s25
          %544 = vsyncadd %s535, 0
          %s545 = smul.addr %s542, 8
          %s546 = scalar_lea.hbm %s3, %s545
          %s547 = sshll.u32 %s538, 4
          %s548 = int_to_ptr.vmem [resolvable:$true] %s547
          %s549 = sshll.u32 %s546, 4
          %s550 = int_to_ptr.hbm [resolvable:$true] %s549
          %555 = dma.vmem_to_hbm [thread:$0]  %s548, 2048, %s550, %s535, 128, 128, 8
        $region52: #{tpu_custom_call.1} parent=31 // pred_fallthru
          _
      $region32: #{tpu_custom_call.1} parent=5 // pred_fallthru
        _
      %p556 = scmp.le.s32.totalorder 2, %s16
      // Predicated region
      $region53: #{tpu_custom_call.1} parent=5 // pred_check
        %p557 = pneg %p556
      $region54: #{tpu_custom_call.1} parent=5 // pred_check_branch
        %559 = sbr.rel (%p557) target = $region56
      $region55: #{tpu_custom_call.1} parent=5 // pred_region
        %s560 = ssub.s32 %s16, 2
        // Predicated region
        $region57: #{tpu_custom_call.1} parent=55 // pred_check
          %p561 = pneg %p132
        $region58: #{tpu_custom_call.1} parent=55 // pred_check_branch
          %563 = sbr.rel (%p561) target = $region60
        $region59: #{tpu_custom_call.1} parent=55 // pred_region
          %s564 = sand.u32 %s117, 1
          %s565 = scalar_lea.sflag [#allocation5], %s564
          %s566 = sand.u32 %s117, 1
          %s567 = smul.addr %s566, 128
          %s568 = scalar_lea.vmem [#allocation8], %s567
          %570 = dma.done %s565, 2048
        $region60: #{tpu_custom_call.1} parent=55 // pred_fallthru
          _
      $region56: #{tpu_custom_call.1} parent=5 // pred_fallthru
        _
    $region6: #{tpu_custom_call.1} parent=1 // loop_footer
      %s20 = sadd.s32 1, %s16
    $region7: #{tpu_custom_call.1} parent=1 // loop_footer_branch
      %15 = sbr.rel target = $region3
    $region8: #{tpu_custom_call.1} parent=1 // loop_exit
      _
    %571 = vsyncpa [#allocation4], 1
    %s572 = scalar_lea.sflag [#allocation4], 1
    %573 = vsyncpa %s572, 1
    %574 = vsyncpa [#allocation7], 1
    %575 = vsyncpa [#allocation5], 1
    %s576 = scalar_lea.sflag [#allocation5], 1
    %577 = vsyncpa %s576, 1

</llo_original>
